<compile_context>
chip_gen: v5e
topology: v5e:2x2
jax: 0.10.0
libtpu: 0.0.40
codegen_flags: <defaults>
</compile_context>

<pallas_src>
import jax
import jax.numpy as jnp
from jax.experimental import pallas as pl
from jax.experimental.pallas import tpu as pltpu


NEG_SLOPE = 0.01   # nn.LeakyReLU() default negative_slope
LANE = 128         # TPU lane width


def _graph_ablation_kernel(adj_ref, cemb_ref, nemb_ref, w_ref, b_ref, out_ref):
    # adj_ref  : (TM, N)  row panel of the adjacency
    # cemb_ref : (N, C)   full, VMEM-resident across grid steps
    # nemb_ref : (N, C)   full, VMEM-resident across grid steps
    # w_ref    : (C, GP)  pre-transposed, lane-padded dense weight
    # b_ref    : (1, GP)  lane-padded bias
    # out_ref  : (2, TM, GP)  [0]=co rows, [1]=no rows for this row panel
    i = pl.program_id(0)
    tm = adj_ref.shape[0]

    c_full = cemb_ref[...]
    n_full = nemb_ref[...]
    e_full = c_full + n_full                                  # f32 VPU add

    # Dominant matmul: one fused adj @ (c_emb + n_emb), bf16 operands
    # (adj is 0/1 so exact), f32 accumulation on the MXU.
    s = jnp.dot(adj_ref[...].astype(jnp.bfloat16),
                e_full.astype(jnp.bfloat16),
                preferred_element_type=jnp.float32)           # (TM, C)

    row0 = pl.multiple_of(i * tm, tm)
    c_blk = cemb_ref[pl.ds(row0, tm), :]                      # (TM, C)
    n_blk = nemb_ref[pl.ds(row0, tm), :]                      # (TM, C)

    # Stack the two output matmuls along M: one MXU dispatch, W stays resident.
    lhs = jnp.concatenate([c_blk + s, n_blk + s], axis=0)     # (2*TM, C) f32
    pre = jnp.dot(lhs, w_ref[...],
                  preferred_element_type=jnp.float32) + b_ref[...]   # (2*TM, GP)
    act = jnp.where(pre >= 0, pre, NEG_SLOPE * pre)           # LeakyReLU, f32

    out_ref[0, :, :] = act[:tm].astype(out_ref.dtype)
    out_ref[1, :, :] = act[tm:].astype(out_ref.dtype)


def prepare_dense_params(weight, bias, lane=LANE):
    """One-time (init-time) prep of the nn.Linear params.

    weight: (G, C) torch-layout  ->  (C, GP) pre-transposed, zero-padded
    bias:   (G,)                 ->  (1, GP) zero-padded
    GP = G rounded up to a multiple of 128 so kernel stores are lane-dense.
    """
    g, c = weight.shape
    gp = ((g + lane - 1) // lane) * lane
    w_pad = jnp.zeros((c, gp), jnp.float32).at[:, :g].set(weight.T.astype(jnp.float32))
    b_pad = jnp.zeros((1, gp), jnp.float32).at[:, :g].set(bias.astype(jnp.float32))
    return w_pad, b_pad


def graph_layer_ablation(code_x, neighbor, c_embeddings, n_embeddings,
                         adj, w_pad, b_pad, graph_size, *, tm=128):
    """Pallas forward of GraphLayerAblation.

    code_x / neighbor are accepted only for API parity with the PyTorch module;
    under the ablation (torch.ones_like) they are dead and never reach the kernel.
    """
    del code_x, neighbor
    n, c = c_embeddings.shape
    gp = w_pad.shape[1]
    tm = min(tm, n)
    assert n % tm == 0, "row tile must divide N"
    grid = (n // tm,)

    cost = pl.CostEstimate(
        flops=2 * n * n * c + 2 * (2 * n) * c * gp,
        transcendentals=0,
        bytes_accessed=4 * (n * n + 2 * n * c + c * gp + gp + 2 * n * gp),
    )

    out = pl.pallas_call(
        _graph_ablation_kernel,
        out_shape=jax.ShapeDtypeStruct((2, n, gp), jnp.float32),
        grid_spec=pltpu.PrefetchScalarGridSpec(
            num_scalar_prefetch=0,
            grid=grid,
            in_specs=[
                pl.BlockSpec((tm, n), lambda i: (i, 0)),   # adj row panel
                pl.BlockSpec((n, c), lambda i: (0, 0)),    # c_embeddings (resident)
                pl.BlockSpec((n, c), lambda i: (0, 0)),    # n_embeddings (resident)
                pl.BlockSpec((c, gp), lambda i: (0, 0)),   # W (pre-transposed/padded)
                pl.BlockSpec((1, gp), lambda i: (0, 0)),   # bias (padded)
            ],
            out_specs=pl.BlockSpec((2, tm, gp), lambda i: (0, i, 0)),
        ),
        compiler_params=pltpu.CompilerParams(
            dimension_semantics=("parallel",),
        ),
        cost_estimate=cost,
    )(adj, c_embeddings, n_embeddings, w_pad, b_pad)

    co = out[0, :, :graph_size]
    no = out[1, :, :graph_size]
    return co, no


def _reference(code_x, neighbor, c_embeddings, n_embeddings, adj, weight, bias):
    # Plain-JAX f32 mirror of the PyTorch forward (including the ablation).
    center_codes = jnp.ones_like(code_x)[:, None]
    neighbor_codes = jnp.ones_like(neighbor)[:, None]
    c_emb = center_codes * c_embeddings
    n_emb = neighbor_codes * n_embeddings
    cc = center_codes * (adj @ c_emb)
    cn = center_codes * (adj @ n_emb)
    nn_ = neighbor_codes * (adj @ n_emb)
    nc = neighbor_codes * (adj @ c_emb)
    dense = lambda x: x @ weight.T + bias
    leaky = lambda x: jnp.where(x >= 0, x, NEG_SLOPE * x)
    return leaky(dense(c_emb + cc + cn)), leaky(dense(n_emb + nn_ + nc))


if __name__ == "__main__":
    # Small, module-consistent shapes: N graph nodes, code_size C, graph_size G.
    N, C, G = 128, 64, 32

    key = jax.random.PRNGKey(0)
    k1, k2, k3, k4, k5, k6, k7 = jax.random.split(key, 7)

    code_x = (jax.random.uniform(k1, (N,)) > 0.5).astype(jnp.float32)
    neighbor = (jax.random.uniform(k2, (N,)) > 0.5).astype(jnp.float32)
    c_embeddings = jax.random.normal(k3, (N, C), dtype=jnp.float32)
    n_embeddings = jax.random.normal(k4, (N, C), dtype=jnp.float32)
    adj = (jax.random.uniform(k5, (N, N)) > 0.8).astype(jnp.float32)

    # nn.Linear(code_size=C, graph_size=G) parameters (torch default-ish init).
    bound = 1.0 / (C ** 0.5)
    weight = jax.random.uniform(k6, (G, C), minval=-bound, maxval=bound,
                                dtype=jnp.float32)
    bias = jax.random.uniform(k7, (G,), minval=-bound, maxval=bound,
                              dtype=jnp.float32)

    # One-time parameter prep (hoisted out of the per-call path).
    w_pad, b_pad = prepare_dense_params(weight, bias)

    co, no = graph_layer_ablation(code_x, neighbor, c_embeddings, n_embeddings,
                                  adj, w_pad, b_pad, G)
    jax.block_until_ready((co, no))

    co_ref, no_ref = _reference(code_x, neighbor, c_embeddings, n_embeddings,
                                adj, weight, bias)
    assert co.shape == (N, G) and no.shape == (N, G)
    # Tolerance accounts for the bf16 operands of the dominant matmul
    # (f32 accumulation); adj itself is 0/1 and therefore exact in bf16.
    assert jnp.allclose(co, co_ref, atol=1e-1, rtol=1e-1)
    assert jnp.allclose(no, no_ref, atol=1e-1, rtol=1e-1)

    print("KERNEL_OK")
</pallas_src>

<mosaic_0001>
module attributes {stable_mosaic.version = 11 : i64} {
  func.func @_graph_ablation_kernel(%arg0: i32, %arg1: memref<128x128xf32, #tpu.memory_space<vmem>>, %arg2: memref<128x64xf32, #tpu.memory_space<vmem>>, %arg3: memref<128x64xf32, #tpu.memory_space<vmem>>, %arg4: memref<64x128xf32, #tpu.memory_space<vmem>>, %arg5: memref<1x128xf32, #tpu.memory_space<vmem>>, %arg6: memref<2x128x128xf32, #tpu.memory_space<vmem>>) attributes {dimension_semantics = [#tpu.dimension_semantics<parallel>], iteration_bounds = array<i64: 1>, scalar_prefetch = 0 : i64, scratch_operands = 0 : i64, tpu.core_type = #tpu.core_type<tc>, window_params = [{transform_indices = @transform_0, window_bounds = array<i64: 128, 128>}, {pipeline_mode = #tpu.pipeline_mode<synchronous>, transform_indices = @transform_1, window_bounds = array<i64: 128, 64>}, {pipeline_mode = #tpu.pipeline_mode<synchronous>, transform_indices = @transform_2, window_bounds = array<i64: 128, 64>}, {pipeline_mode = #tpu.pipeline_mode<synchronous>, transform_indices = @transform_3, window_bounds = array<i64: 64, 128>}, {pipeline_mode = #tpu.pipeline_mode<synchronous>, transform_indices = @transform_4, window_bounds = array<i64: 1, 128>}, {transform_indices = @transform_5, window_bounds = array<i64: 2, 128, 128>}]} {
    %c0 = arith.constant 0 : index
    %c0_0 = arith.constant 0 : index
    %0 = vector.load %arg2[%c0, %c0_0] : memref<128x64xf32, #tpu.memory_space<vmem>>, vector<128x64xf32>
    %c0_1 = arith.constant 0 : index
    %c0_2 = arith.constant 0 : index
    %1 = vector.load %arg3[%c0_1, %c0_2] : memref<128x64xf32, #tpu.memory_space<vmem>>, vector<128x64xf32>
    %2 = arith.addf %0, %1 : vector<128x64xf32>
    %c0_3 = arith.constant 0 : index
    %c0_4 = arith.constant 0 : index
    %3 = vector.load %arg1[%c0_3, %c0_4] : memref<128x128xf32, #tpu.memory_space<vmem>>, vector<128x128xf32>
    %4 = arith.truncf %3 : vector<128x128xf32> to vector<128x128xbf16>
    %5 = arith.truncf %2 : vector<128x64xf32> to vector<128x64xbf16>
    %cst = arith.constant dense<0.000000e+00> : vector<128x64xf32>
    %6 = tpu.matmul %4, %5, %cst {dimension_numbers = #tpu.dot_dimension_numbers<[1], [0], [0], [1], [0, 0, 1, 1], [], []>} : vector<128x128xbf16>, vector<128x64xbf16>, vector<128x64xf32> -> vector<128x64xf32>
    %c128_i32 = arith.constant 128 : i32
    %7 = arith.muli %arg0, %c128_i32 : i32
    %8 = tpu.assume_multiple %7, 128 : i32
    %9 = arith.index_cast %8 : i32 to index
    %c0_5 = arith.constant 0 : index
    %10 = vector.load %arg2[%9, %c0_5] : memref<128x64xf32, #tpu.memory_space<vmem>>, vector<128x64xf32>
    %11 = arith.index_cast %8 : i32 to index
    %c0_6 = arith.constant 0 : index
    %12 = vector.load %arg3[%11, %c0_6] : memref<128x64xf32, #tpu.memory_space<vmem>>, vector<128x64xf32>
    %13 = arith.addf %10, %6 : vector<128x64xf32>
    %14 = arith.addf %12, %6 : vector<128x64xf32>
    %15 = tpu.concatenate %13, %14 in 0 : vector<128x64xf32>, vector<128x64xf32> -> vector<256x64xf32>
    %c0_7 = arith.constant 0 : index
    %c0_8 = arith.constant 0 : index
    %16 = vector.load %arg4[%c0_7, %c0_8] : memref<64x128xf32, #tpu.memory_space<vmem>>, vector<64x128xf32>
    %cst_9 = arith.constant dense<0.000000e+00> : vector<256x128xf32>
    %17 = tpu.matmul %15, %16, %cst_9 {dimension_numbers = #tpu.dot_dimension_numbers<[1], [0], [0], [1], [0, 0, 1, 1], [], []>} : vector<256x64xf32>, vector<64x128xf32>, vector<256x128xf32> -> vector<256x128xf32>
    %c0_10 = arith.constant 0 : index
    %c0_11 = arith.constant 0 : index
    %18 = vector.load %arg5[%c0_10, %c0_11] : memref<1x128xf32, #tpu.memory_space<vmem>>, vector<1x128xf32>
    %19 = vector.broadcast %18 : vector<1x128xf32> to vector<256x128xf32>
    %20 = arith.addf %17, %19 : vector<256x128xf32>
    %cst_12 = arith.constant 0.000000e+00 : f32
    %21 = vector.broadcast %cst_12 : f32 to vector<256x128xf32>
    %22 = arith.cmpf oge, %20, %21 : vector<256x128xf32>
    %cst_13 = arith.constant 0.00999999977 : f32
    %23 = vector.broadcast %cst_13 : f32 to vector<256x128xf32>
    %24 = arith.mulf %23, %20 : vector<256x128xf32>
    %25 = arith.select %22, %20, %24 : vector<256x128xi1>, vector<256x128xf32>
    %26 = vector.extract_strided_slice %25 {offsets = [0, 0], sizes = [128, 128], strides = [1, 1]} : vector<256x128xf32> to vector<128x128xf32>
    %c0_14 = arith.constant 0 : index
    %c0_15 = arith.constant 0 : index
    %c0_16 = arith.constant 0 : index
    %27 = vector.load %arg6[%c0_14, %c0_15, %c0_16] : memref<2x128x128xf32, #tpu.memory_space<vmem>>, vector<1x128x128xf32>
    %28 = vector.shape_cast %27 : vector<1x128x128xf32> to vector<128x128xf32>
    %29 = vector.shape_cast %26 : vector<128x128xf32> to vector<1x128x128xf32>
    tpu.vector_store %arg6[%c0_14, %c0_15, %c0_16], %29 {strides = array<i32>} : memref<2x128x128xf32, #tpu.memory_space<vmem>>, vector<1x128x128xf32>,
    %30 = vector.extract_strided_slice %25 {offsets = [128, 0], sizes = [128, 128], strides = [1, 1]} : vector<256x128xf32> to vector<128x128xf32>
    %c1 = arith.constant 1 : index
    %c0_17 = arith.constant 0 : index
    %c0_18 = arith.constant 0 : index
    %31 = vector.load %arg6[%c1, %c0_17, %c0_18] : memref<2x128x128xf32, #tpu.memory_space<vmem>>, vector<1x128x128xf32>
    %32 = vector.shape_cast %31 : vector<1x128x128xf32> to vector<128x128xf32>
    %33 = vector.shape_cast %30 : vector<128x128xf32> to vector<1x128x128xf32>
    tpu.vector_store %arg6[%c1, %c0_17, %c0_18], %33 {strides = array<i32>} : memref<2x128x128xf32, #tpu.memory_space<vmem>>, vector<1x128x128xf32>,
    return
  }
  func.func @transform_0(%arg0: i32) -> (i32, i32) {
    %c0_i32 = arith.constant 0 : i32
    %c0_i32_0 = arith.constant 0 : i32
    return %arg0, %c0_i32 : i32, i32
  }
  func.func @transform_1(%arg0: i32) -> (i32, i32) {
    %c0_i32 = arith.constant 0 : i32
    %c0_i32_0 = arith.constant 0 : i32
    %c0_i32_1 = arith.constant 0 : i32
    return %c0_i32, %c0_i32_0 : i32, i32
  }
  func.func @transform_2(%arg0: i32) -> (i32, i32) {
    %c0_i32 = arith.constant 0 : i32
    %c0_i32_0 = arith.constant 0 : i32
    %c0_i32_1 = arith.constant 0 : i32
    return %c0_i32, %c0_i32_0 : i32, i32
  }
  func.func @transform_3(%arg0: i32) -> (i32, i32) {
    %c0_i32 = arith.constant 0 : i32
    %c0_i32_0 = arith.constant 0 : i32
    %c0_i32_1 = arith.constant 0 : i32
    return %c0_i32, %c0_i32_0 : i32, i32
  }
  func.func @transform_4(%arg0: i32) -> (i32, i32) {
    %c0_i32 = arith.constant 0 : i32
    %c0_i32_0 = arith.constant 0 : i32
    %c0_i32_1 = arith.constant 0 : i32
    return %c0_i32, %c0_i32_0 : i32, i32
  }
  func.func @transform_5(%arg0: i32) -> (i32, i32, i32) {
    %c0_i32 = arith.constant 0 : i32
    %c0_i32_0 = arith.constant 0 : i32
    %c0_i32_1 = arith.constant 0 : i32
    return %c0_i32, %arg0, %c0_i32_0 : i32, i32, i32
  }
}

</mosaic_0001>

<llo_original>
// kernel: tpu_custom_call.1
$region0: #{tpu_custom_call.1}
  #allocation0 [shape = 'u32[]', space=smem, size = 0x4, offset = 0x4, fixed_abs, tag = 'smem constant byte address 0x4 - core index']
  #allocation1 [shape = 'u32[72,128]{1,0:T(1,128)}', space=vmem, size = 0x9000, scoped, tag = 'internal scratch']
  %s0 = inlined_call_operand.vmem [shape: f32[128,128], index: 0, kind: input, shape index: {}]
  %s1 = inlined_call_operand.vmem [shape: f32[128,64], index: 1, kind: input, shape index: {}]
  %s2 = inlined_call_operand.vmem [shape: f32[128,64], index: 2, kind: input, shape index: {}]
  %s3 = inlined_call_operand.vmem [shape: f32[64,128], index: 3, kind: input, shape index: {}]
  %s4 = inlined_call_operand.vmem [shape: f32[1,128], index: 4, kind: input, shape index: {}]
  %s5 = inlined_call_operand.hbm [shape: f32[2,128,128], index: 5, kind: output, shape index: {}]
  %s6 = sld [smem:[#allocation0]]
  $region30: #{tpu_custom_call.1} parent=0
    _
  %s8 = ssub.s32 1, %s6
  %s9 = scalar_select 0, %s8, %s6
  $region1: #{tpu_custom_call.1} parent=0
    #allocation2 [shape = 'u8[131072]{0}', space=vmem, size = 0x20000, scoped, tag = 'output window, operand 0, single buffered']
    #allocation3 [shape = 's32[1]{0}', space=sflag, size = 0x4, scoped, tag = 'scoped memory for tpu_custom_call.1']
    %10 = vsyncpa [#allocation3], 0
    // Predicated region
    $region2: #{tpu_custom_call.1} parent=1 // pred_check
      _
    $region3: #{tpu_custom_call.1} parent=1 // pred_check_branch
      %12 = sbr.rel (0) target = $region5
    $region4: #{tpu_custom_call.1} parent=1 // pred_region
      _
    $region5: #{tpu_custom_call.1} parent=1 // pred_fallthru
      _
    // Predicated region
    $region6: #{tpu_custom_call.1} parent=1 // pred_check
      _
    $region7: #{tpu_custom_call.1} parent=1 // pred_check_branch
      %14 = sbr.rel (0) target = $region9
    $region8: #{tpu_custom_call.1} parent=1 // pred_region
      _
    $region9: #{tpu_custom_call.1} parent=1 // pred_fallthru
      _
    // Predicated region
    $region10: #{tpu_custom_call.1} parent=1 // pred_check
      _
    $region11: #{tpu_custom_call.1} parent=1 // pred_check_branch
      %16 = sbr.rel (0) target = $region13
    $region12: #{tpu_custom_call.1} parent=1 // pred_region
      _
    $region13: #{tpu_custom_call.1} parent=1 // pred_fallthru
      _
    // Predicated region
    $region14: #{tpu_custom_call.1} parent=1 // pred_check
      _
    $region15: #{tpu_custom_call.1} parent=1 // pred_check_branch
      %18 = sbr.rel (0) target = $region17
    $region16: #{tpu_custom_call.1} parent=1 // pred_region
      _
    $region17: #{tpu_custom_call.1} parent=1 // pred_fallthru
      _
    // Predicated region
    $region18: #{tpu_custom_call.1} parent=1 // pred_check
      _
    $region19: #{tpu_custom_call.1} parent=1 // pred_check_branch
      %20 = sbr.rel (0) target = $region21
    $region20: #{tpu_custom_call.1} parent=1 // pred_region
      _
    $region21: #{tpu_custom_call.1} parent=1 // pred_fallthru
      _
    %v21 = vld [vmem:[%s1] sm:$0xff]
    %v22 = vld [vmem:[%s1 + $0x8] sm:$0xff]
    %v23 = vld [vmem:[%s1 + $0x10] sm:$0xff]
    %v24 = vld [vmem:[%s1 + $0x18] sm:$0xff]
    %v25 = vld [vmem:[%s1 + $0x20] sm:$0xff]
    %v26 = vld [vmem:[%s1 + $0x28] sm:$0xff]
    %v27 = vld [vmem:[%s1 + $0x30] sm:$0xff]
    %v28 = vld [vmem:[%s1 + $0x38] sm:$0xff]
    %v29 = vld [vmem:[%s1 + $0x40] sm:$0xff]
    %v30 = vld [vmem:[%s1 + $0x48] sm:$0xff]
    %v31 = vld [vmem:[%s1 + $0x50] sm:$0xff]
    %v32 = vld [vmem:[%s1 + $0x58] sm:$0xff]
    %v33 = vld [vmem:[%s1 + $0x60] sm:$0xff]
    %v34 = vld [vmem:[%s1 + $0x68] sm:$0xff]
    %v35 = vld [vmem:[%s1 + $0x70] sm:$0xff]
    %v36 = vld [vmem:[%s1 + $0x78] sm:$0xff]
    %v37 = vld [vmem:[%s2] sm:$0xff]
    %v38 = vld [vmem:[%s2 + $0x8] sm:$0xff]
    %v39 = vld [vmem:[%s2 + $0x10] sm:$0xff]
    %v40 = vld [vmem:[%s2 + $0x18] sm:$0xff]
    %v41 = vld [vmem:[%s2 + $0x20] sm:$0xff]
    %v42 = vld [vmem:[%s2 + $0x28] sm:$0xff]
    %v43 = vld [vmem:[%s2 + $0x30] sm:$0xff]
    %v44 = vld [vmem:[%s2 + $0x38] sm:$0xff]
    %v45 = vld [vmem:[%s2 + $0x40] sm:$0xff]
    %v46 = vld [vmem:[%s2 + $0x48] sm:$0xff]
    %v47 = vld [vmem:[%s2 + $0x50] sm:$0xff]
    %v48 = vld [vmem:[%s2 + $0x58] sm:$0xff]
    %v49 = vld [vmem:[%s2 + $0x60] sm:$0xff]
    %v50 = vld [vmem:[%s2 + $0x68] sm:$0xff]
    %v51 = vld [vmem:[%s2 + $0x70] sm:$0xff]
    %v52 = vld [vmem:[%s2 + $0x78] sm:$0xff]
    %v53 = vadd.f32 %v21, %v37
    %v54 = vadd.f32 %v22, %v38
    %v55 = vadd.f32 %v23, %v39
    %v56 = vadd.f32 %v24, %v40
    %v57 = vadd.f32 %v25, %v41
    %v58 = vadd.f32 %v26, %v42
    %v59 = vadd.f32 %v27, %v43
    %v60 = vadd.f32 %v28, %v44
    %v61 = vadd.f32 %v29, %v45
    %v62 = vadd.f32 %v30, %v46
    %v63 = vadd.f32 %v31, %v47
    %v64 = vadd.f32 %v32, %v48
    %v65 = vadd.f32 %v33, %v49
    %v66 = vadd.f32 %v34, %v50
    %v67 = vadd.f32 %v35, %v51
    %v68 = vadd.f32 %v36, %v52
    %v69 = vld [vmem:[%s0] sm:$0xff]
    %v70 = vld [vmem:[%s0 + $0x8] sm:$0xff]
    %v71 = vld [vmem:[%s0 + $0x10] sm:$0xff]
    %v72 = vld [vmem:[%s0 + $0x18] sm:$0xff]
    %v73 = vld [vmem:[%s0 + $0x20] sm:$0xff]
    %v74 = vld [vmem:[%s0 + $0x28] sm:$0xff]
    %v75 = vld [vmem:[%s0 + $0x30] sm:$0xff]
    %v76 = vld [vmem:[%s0 + $0x38] sm:$0xff]
    %v77 = vld [vmem:[%s0 + $0x40] sm:$0xff]
    %v78 = vld [vmem:[%s0 + $0x48] sm:$0xff]
    %v79 = vld [vmem:[%s0 + $0x50] sm:$0xff]
    %v80 = vld [vmem:[%s0 + $0x58] sm:$0xff]
    %v81 = vld [vmem:[%s0 + $0x60] sm:$0xff]
    %v82 = vld [vmem:[%s0 + $0x68] sm:$0xff]
    %v83 = vld [vmem:[%s0 + $0x70] sm:$0xff]
    %v84 = vld [vmem:[%s0 + $0x78] sm:$0xff]
    %v85 = vpack.c.bf16 %v70, %v69
    %v86 = vpack.c.bf16 %v72, %v71
    %v87 = vpack.c.bf16 %v74, %v73
    %v88 = vpack.c.bf16 %v76, %v75
    %v89 = vpack.c.bf16 %v78, %v77
    %v90 = vpack.c.bf16 %v80, %v79
    %v91 = vpack.c.bf16 %v82, %v81
    %v92 = vpack.c.bf16 %v84, %v83
    %v93 = vpack.c.bf16 %v54, %v53
    %v94 = vpack.c.bf16 %v56, %v55
    %v95 = vpack.c.bf16 %v58, %v57
    %v96 = vpack.c.bf16 %v60, %v59
    %v97 = vpack.c.bf16 %v62, %v61
    %v98 = vpack.c.bf16 %v64, %v63
    %v99 = vpack.c.bf16 %v66, %v65
    %v100 = vpack.c.bf16 %v68, %v67
    %101 = vmatpush.bf16.msra.mxu0 %v100
    %102 = vmatpush.bf16.msra.mxu0 %v99
    %103 = vmatpush.bf16.msra.mxu0 %v98
    %104 = vmatpush.bf16.msra.mxu0 %v97
    %105 = vmatpush.bf16.msra.mxu0 %v96
    %106 = vmatpush.bf16.msra.mxu0 %v95
    %107 = vmatpush.bf16.msra.mxu0 %v94
    %108 = vmatpush.bf16.msra.mxu0 %v93
    %109 = vmatmul.bf16.gmra.mxu0 %v85
    %v110 = vpop.f32.mrf.mxu0
    %v111 = vadd.f32 0.0, %v110
    %v112 = vpop.f32.mrf.mxu0
    %v113 = vadd.f32 0.0, %v112
    %114 = vmatmul.bf16.gmra.mxu0 %v86
    %v115 = vpop.f32.mrf.mxu0
    %v116 = vadd.f32 0.0, %v115
    %v117 = vpop.f32.mrf.mxu0
    %v118 = vadd.f32 0.0, %v117
    %119 = vmatmul.bf16.gmra.mxu0 %v87
    %v120 = vpop.f32.mrf.mxu0
    %v121 = vadd.f32 0.0, %v120
    %v122 = vpop.f32.mrf.mxu0
    %v123 = vadd.f32 0.0, %v122
    %124 = vmatmul.bf16.gmra.mxu0 %v88
    %v125 = vpop.f32.mrf.mxu0
    %v126 = vadd.f32 0.0, %v125
    %v127 = vpop.f32.mrf.mxu0
    %v128 = vadd.f32 0.0, %v127
    %129 = vmatmul.bf16.gmra.mxu0 %v89
    %v130 = vpop.f32.mrf.mxu0
    %v131 = vadd.f32 0.0, %v130
    %v132 = vpop.f32.mrf.mxu0
    %v133 = vadd.f32 0.0, %v132
    %134 = vmatmul.bf16.gmra.mxu0 %v90
    %v135 = vpop.f32.mrf.mxu0
    %v136 = vadd.f32 0.0, %v135
    %v137 = vpop.f32.mrf.mxu0
    %v138 = vadd.f32 0.0, %v137
    %139 = vmatmul.bf16.gmra.mxu0 %v91
    %v140 = vpop.f32.mrf.mxu0
    %v141 = vadd.f32 0.0, %v140
    %v142 = vpop.f32.mrf.mxu0
    %v143 = vadd.f32 0.0, %v142
    %144 = vmatmul.bf16.gmra.mxu0 %v92
    %v145 = vpop.f32.mrf.mxu0
    %v146 = vadd.f32 0.0, %v145
    %v147 = vpop.f32.mrf.mxu0
    %v148 = vadd.f32 0.0, %v147
    %149 = vdwg.mxu0
    %s150 = smul.u32 0, 128
    %s151 = scalar_lea.vmem %s1, %s150
    %v152 = vld [vmem:[%s151] sm:$0xff]
    %v153 = vld [vmem:[%s151 + $0x8] sm:$0xff]
    %v154 = vld [vmem:[%s151 + $0x10] sm:$0xff]
    %v155 = vld [vmem:[%s151 + $0x18] sm:$0xff]
    %v156 = vld [vmem:[%s151 + $0x20] sm:$0xff]
    %v157 = vld [vmem:[%s151 + $0x28] sm:$0xff]
    %v158 = vld [vmem:[%s151 + $0x30] sm:$0xff]
    %v159 = vld [vmem:[%s151 + $0x38] sm:$0xff]
    %v160 = vld [vmem:[%s151 + $0x40] sm:$0xff]
    %v161 = vld [vmem:[%s151 + $0x48] sm:$0xff]
    %v162 = vld [vmem:[%s151 + $0x50] sm:$0xff]
    %v163 = vld [vmem:[%s151 + $0x58] sm:$0xff]
    %v164 = vld [vmem:[%s151 + $0x60] sm:$0xff]
    %v165 = vld [vmem:[%s151 + $0x68] sm:$0xff]
    %v166 = vld [vmem:[%s151 + $0x70] sm:$0xff]
    %v167 = vld [vmem:[%s151 + $0x78] sm:$0xff]
    %s168 = scalar_lea.vmem %s2, %s150
    %v169 = vld [vmem:[%s168] sm:$0xff]
    %v170 = vld [vmem:[%s168 + $0x8] sm:$0xff]
    %v171 = vld [vmem:[%s168 + $0x10] sm:$0xff]
    %v172 = vld [vmem:[%s168 + $0x18] sm:$0xff]
    %v173 = vld [vmem:[%s168 + $0x20] sm:$0xff]
    %v174 = vld [vmem:[%s168 + $0x28] sm:$0xff]
    %v175 = vld [vmem:[%s168 + $0x30] sm:$0xff]
    %v176 = vld [vmem:[%s168 + $0x38] sm:$0xff]
    %v177 = vld [vmem:[%s168 + $0x40] sm:$0xff]
    %v178 = vld [vmem:[%s168 + $0x48] sm:$0xff]
    %v179 = vld [vmem:[%s168 + $0x50] sm:$0xff]
    %v180 = vld [vmem:[%s168 + $0x58] sm:$0xff]
    %v181 = vld [vmem:[%s168 + $0x60] sm:$0xff]
    %v182 = vld [vmem:[%s168 + $0x68] sm:$0xff]
    %v183 = vld [vmem:[%s168 + $0x70] sm:$0xff]
    %v184 = vld [vmem:[%s168 + $0x78] sm:$0xff]
    %v185 = vadd.f32 %v152, %v111
    %v186 = vadd.f32 %v153, %v113
    %v187 = vadd.f32 %v154, %v116
    %v188 = vadd.f32 %v155, %v118
    %v189 = vadd.f32 %v156, %v121
    %v190 = vadd.f32 %v157, %v123
    %v191 = vadd.f32 %v158, %v126
    %v192 = vadd.f32 %v159, %v128
    %v193 = vadd.f32 %v160, %v131
    %v194 = vadd.f32 %v161, %v133
    %v195 = vadd.f32 %v162, %v136
    %v196 = vadd.f32 %v163, %v138
    %v197 = vadd.f32 %v164, %v141
    %v198 = vadd.f32 %v165, %v143
    %v199 = vadd.f32 %v166, %v146
    %v200 = vadd.f32 %v167, %v148
    %v201 = vadd.f32 %v169, %v111
    %v202 = vadd.f32 %v170, %v113
    %v203 = vadd.f32 %v171, %v116
    %v204 = vadd.f32 %v172, %v118
    %v205 = vadd.f32 %v173, %v121
    %v206 = vadd.f32 %v174, %v123
    %v207 = vadd.f32 %v175, %v126
    %v208 = vadd.f32 %v176, %v128
    %v209 = vadd.f32 %v177, %v131
    %v210 = vadd.f32 %v178, %v133
    %v211 = vadd.f32 %v179, %v136
    %v212 = vadd.f32 %v180, %v138
    %v213 = vadd.f32 %v181, %v141
    %v214 = vadd.f32 %v182, %v143
    %v215 = vadd.f32 %v183, %v146
    %v216 = vadd.f32 %v184, %v148
    %v217 = vld [vmem:[%s3] sm:$0xff]
    %v218 = vld [vmem:[%s3 + $0x8] sm:$0xff]
    %v219 = vld [vmem:[%s3 + $0x10] sm:$0xff]
    %v220 = vld [vmem:[%s3 + $0x18] sm:$0xff]
    %v221 = vld [vmem:[%s3 + $0x20] sm:$0xff]
    %v222 = vld [vmem:[%s3 + $0x28] sm:$0xff]
    %v223 = vld [vmem:[%s3 + $0x30] sm:$0xff]
    %v224 = vld [vmem:[%s3 + $0x38] sm:$0xff]
    %v225 = vld [vmem:[%s4] sm:$0x1]
    %v227 = vperm.slane %v225, 0
    %vm229 = vcmask 523264
    %v231 = vsel %vm229, %v185, 0
    %v234 = vsel %vm229, %v186, 0
    %v237 = vsel %vm229, %v187, 0
    %v240 = vsel %vm229, %v188, 0
    %v243 = vsel %vm229, %v189, 0
    %v246 = vsel %vm229, %v190, 0
    %v249 = vsel %vm229, %v191, 0
    %v252 = vsel %vm229, %v192, 0
    %v255 = vsel %vm229, %v193, 0
    %v258 = vsel %vm229, %v194, 0
    %v261 = vsel %vm229, %v195, 0
    %v264 = vsel %vm229, %v196, 0
    %v267 = vsel %vm229, %v197, 0
    %v270 = vsel %vm229, %v198, 0
    %v273 = vsel %vm229, %v199, 0
    %v276 = vsel %vm229, %v200, 0
    %v279 = vsel %vm229, %v201, 0
    %v282 = vsel %vm229, %v202, 0
    %v285 = vsel %vm229, %v203, 0
    %v288 = vsel %vm229, %v204, 0
    %v291 = vsel %vm229, %v205, 0
    %v294 = vsel %vm229, %v206, 0
    %v297 = vsel %vm229, %v207, 0
    %v300 = vsel %vm229, %v208, 0
    %v303 = vsel %vm229, %v209, 0
    %v306 = vsel %vm229, %v210, 0
    %v309 = vsel %vm229, %v211, 0
    %v312 = vsel %vm229, %v212, 0
    %v315 = vsel %vm229, %v213, 0
    %v318 = vsel %vm229, %v214, 0
    %v321 = vsel %vm229, %v215, 0
    %v324 = vsel %vm229, %v216, 0
    %326 = vmatpush.msra.mxu0 0.0
    %327 = vmatpush.msra.mxu0 0.0
    %328 = vmatpush.msra.mxu0 0.0
    %329 = vmatpush.msra.mxu0 0.0
    %330 = vmatpush.msra.mxu0 0.0
    %331 = vmatpush.msra.mxu0 0.0
    %332 = vmatpush.msra.mxu0 0.0
    %333 = vmatpush.msra.mxu0 0.0
    %334 = vmatpush.msra.mxu0 %v224
    %335 = vmatpush.msra.mxu0 %v223
    %336 = vmatpush.msra.mxu0 %v222
    %337 = vmatpush.msra.mxu0 %v221
    %338 = vmatpush.msra.mxu0 %v220
    %339 = vmatpush.msra.mxu0 %v219
    %340 = vmatpush.msra.mxu0 %v218
    %341 = vmatpush.msra.mxu0 %v217
    %342 = vmatmul.f32.gmra.mxu0 %v231
    %v343 = vpop.f32.mrf.mxu0
    %v344 = vadd.f32 %v227, %v343
    %345 = vmatmul.f32.gmra.mxu0 %v234
    %v346 = vpop.f32.mrf.mxu0
    %v347 = vadd.f32 %v227, %v346
    %348 = vmatmul.f32.gmra.mxu0 %v237
    %v349 = vpop.f32.mrf.mxu0
    %v350 = vadd.f32 %v227, %v349
    %351 = vmatmul.f32.gmra.mxu0 %v240
    %v352 = vpop.f32.mrf.mxu0
    %v353 = vadd.f32 %v227, %v352
    %354 = vmatmul.f32.gmra.mxu0 %v243
    %v355 = vpop.f32.mrf.mxu0
    %v356 = vadd.f32 %v227, %v355
    %357 = vmatmul.f32.gmra.mxu0 %v246
    %v358 = vpop.f32.mrf.mxu0
    %v359 = vadd.f32 %v227, %v358
    %360 = vmatmul.f32.gmra.mxu0 %v249
    %v361 = vpop.f32.mrf.mxu0
    %v362 = vadd.f32 %v227, %v361
    %363 = vmatmul.f32.gmra.mxu0 %v252
    %v364 = vpop.f32.mrf.mxu0
    %v365 = vadd.f32 %v227, %v364
    %366 = vmatmul.f32.gmra.mxu0 %v255
    %v367 = vpop.f32.mrf.mxu0
    %v368 = vadd.f32 %v227, %v367
    %369 = vmatmul.f32.gmra.mxu0 %v258
    %v370 = vpop.f32.mrf.mxu0
    %v371 = vadd.f32 %v227, %v370
    %372 = vmatmul.f32.gmra.mxu0 %v261
    %v373 = vpop.f32.mrf.mxu0
    %v374 = vadd.f32 %v227, %v373
    %375 = vmatmul.f32.gmra.mxu0 %v264
    %v376 = vpop.f32.mrf.mxu0
    %v377 = vadd.f32 %v227, %v376
    %378 = vmatmul.f32.gmra.mxu0 %v267
    %v379 = vpop.f32.mrf.mxu0
    %v380 = vadd.f32 %v227, %v379
    %381 = vmatmul.f32.gmra.mxu0 %v270
    %v382 = vpop.f32.mrf.mxu0
    %v383 = vadd.f32 %v227, %v382
    %384 = vmatmul.f32.gmra.mxu0 %v273
    %v385 = vpop.f32.mrf.mxu0
    %v386 = vadd.f32 %v227, %v385
    %387 = vmatmul.f32.gmra.mxu0 %v276
    %v388 = vpop.f32.mrf.mxu0
    %v389 = vadd.f32 %v227, %v388
    %390 = vmatmul.f32.gmra.mxu0 %v279
    %v391 = vpop.f32.mrf.mxu0
    %v392 = vadd.f32 %v227, %v391
    %393 = vmatmul.f32.gmra.mxu0 %v282
    %v394 = vpop.f32.mrf.mxu0
    %v395 = vadd.f32 %v227, %v394
    %396 = vmatmul.f32.gmra.mxu0 %v285
    %v397 = vpop.f32.mrf.mxu0
    %v398 = vadd.f32 %v227, %v397
    %399 = vmatmul.f32.gmra.mxu0 %v288
    %v400 = vpop.f32.mrf.mxu0
    %v401 = vadd.f32 %v227, %v400
    %402 = vmatmul.f32.gmra.mxu0 %v291
    %v403 = vpop.f32.mrf.mxu0
    %v404 = vadd.f32 %v227, %v403
    %405 = vmatmul.f32.gmra.mxu0 %v294
    %v406 = vpop.f32.mrf.mxu0
    %v407 = vadd.f32 %v227, %v406
    %408 = vmatmul.f32.gmra.mxu0 %v297
    %v409 = vpop.f32.mrf.mxu0
    %v410 = vadd.f32 %v227, %v409
    %411 = vmatmul.f32.gmra.mxu0 %v300
    %v412 = vpop.f32.mrf.mxu0
    %v413 = vadd.f32 %v227, %v412
    %414 = vmatmul.f32.gmra.mxu0 %v303
    %v415 = vpop.f32.mrf.mxu0
    %v416 = vadd.f32 %v227, %v415
    %417 = vmatmul.f32.gmra.mxu0 %v306
    %v418 = vpop.f32.mrf.mxu0
    %v419 = vadd.f32 %v227, %v418
    %420 = vmatmul.f32.gmra.mxu0 %v309
    %v421 = vpop.f32.mrf.mxu0
    %v422 = vadd.f32 %v227, %v421
    %423 = vmatmul.f32.gmra.mxu0 %v312
    %v424 = vpop.f32.mrf.mxu0
    %v425 = vadd.f32 %v227, %v424
    %426 = vmatmul.f32.gmra.mxu0 %v315
    %v427 = vpop.f32.mrf.mxu0
    %v428 = vadd.f32 %v227, %v427
    %429 = vmatmul.f32.gmra.mxu0 %v318
    %v430 = vpop.f32.mrf.mxu0
    %v431 = vadd.f32 %v227, %v430
    %432 = vmatmul.f32.gmra.mxu0 %v321
    %v433 = vpop.f32.mrf.mxu0
    %v434 = vadd.f32 %v227, %v433
    %435 = vmatmul.f32.gmra.mxu0 %v324
    %v436 = vpop.f32.mrf.mxu0
    %v437 = vadd.f32 %v227, %v436
    %438 = vdwg.mxu0
    %vm439 = vcmp.ge.f32.partialorder %v344, 0.0
    %vm440 = vcmp.ge.f32.partialorder %v347, 0.0
    %vm441 = vcmp.ge.f32.partialorder %v350, 0.0
    %vm442 = vcmp.ge.f32.partialorder %v353, 0.0
    %vm443 = vcmp.ge.f32.partialorder %v356, 0.0
    %vm444 = vcmp.ge.f32.partialorder %v359, 0.0
    %vm445 = vcmp.ge.f32.partialorder %v362, 0.0
    %vm446 = vcmp.ge.f32.partialorder %v365, 0.0
    %vm447 = vcmp.ge.f32.partialorder %v368, 0.0
    %vm448 = vcmp.ge.f32.partialorder %v371, 0.0
    %vm449 = vcmp.ge.f32.partialorder %v374, 0.0
    %vm450 = vcmp.ge.f32.partialorder %v377, 0.0
    %vm451 = vcmp.ge.f32.partialorder %v380, 0.0
    %vm452 = vcmp.ge.f32.partialorder %v383, 0.0
    %vm453 = vcmp.ge.f32.partialorder %v386, 0.0
    %vm454 = vcmp.ge.f32.partialorder %v389, 0.0
    %vm455 = vcmp.ge.f32.partialorder %v392, 0.0
    %vm456 = vcmp.ge.f32.partialorder %v395, 0.0
    %vm457 = vcmp.ge.f32.partialorder %v398, 0.0
    %vm458 = vcmp.ge.f32.partialorder %v401, 0.0
    %vm459 = vcmp.ge.f32.partialorder %v404, 0.0
    %vm460 = vcmp.ge.f32.partialorder %v407, 0.0
    %vm461 = vcmp.ge.f32.partialorder %v410, 0.0
    %vm462 = vcmp.ge.f32.partialorder %v413, 0.0
    %vm463 = vcmp.ge.f32.partialorder %v416, 0.0
    %vm464 = vcmp.ge.f32.partialorder %v419, 0.0
    %vm465 = vcmp.ge.f32.partialorder %v422, 0.0
    %vm466 = vcmp.ge.f32.partialorder %v425, 0.0
    %vm467 = vcmp.ge.f32.partialorder %v428, 0.0
    %vm468 = vcmp.ge.f32.partialorder %v431, 0.0
    %vm469 = vcmp.ge.f32.partialorder %v434, 0.0
    %vm470 = vcmp.ge.f32.partialorder %v437, 0.0
    %v471 = vmul.f32 %v344, 0.01
    %v472 = vmul.f32 %v347, 0.01
    %v473 = vmul.f32 %v350, 0.01
    %v474 = vmul.f32 %v353, 0.01
    %v475 = vmul.f32 %v356, 0.01
    %v476 = vmul.f32 %v359, 0.01
    %v477 = vmul.f32 %v362, 0.01
    %v478 = vmul.f32 %v365, 0.01
    %v479 = vmul.f32 %v368, 0.01
    %v480 = vmul.f32 %v371, 0.01
    %v481 = vmul.f32 %v374, 0.01
    %v482 = vmul.f32 %v377, 0.01
    %v483 = vmul.f32 %v380, 0.01
    %v484 = vmul.f32 %v383, 0.01
    %v485 = vmul.f32 %v386, 0.01
    %v486 = vmul.f32 %v389, 0.01
    %v487 = vmul.f32 %v392, 0.01
    %v488 = vmul.f32 %v395, 0.01
    %v489 = vmul.f32 %v398, 0.01
    %v490 = vmul.f32 %v401, 0.01
    %v491 = vmul.f32 %v404, 0.01
    %v492 = vmul.f32 %v407, 0.01
    %v493 = vmul.f32 %v410, 0.01
    %v494 = vmul.f32 %v413, 0.01
    %v495 = vmul.f32 %v416, 0.01
    %v496 = vmul.f32 %v419, 0.01
    %v497 = vmul.f32 %v422, 0.01
    %v498 = vmul.f32 %v425, 0.01
    %v499 = vmul.f32 %v428, 0.01
    %v500 = vmul.f32 %v431, 0.01
    %v501 = vmul.f32 %v434, 0.01
    %v502 = vmul.f32 %v437, 0.01
    %v503 = vsel %vm439, %v344, %v471
    %v504 = vsel %vm440, %v347, %v472
    %v505 = vsel %vm441, %v350, %v473
    %v506 = vsel %vm442, %v353, %v474
    %v507 = vsel %vm443, %v356, %v475
    %v508 = vsel %vm444, %v359, %v476
    %v509 = vsel %vm445, %v362, %v477
    %v510 = vsel %vm446, %v365, %v478
    %v511 = vsel %vm447, %v368, %v479
    %v512 = vsel %vm448, %v371, %v480
    %v513 = vsel %vm449, %v374, %v481
    %v514 = vsel %vm450, %v377, %v482
    %v515 = vsel %vm451, %v380, %v483
    %v516 = vsel %vm452, %v383, %v484
    %v517 = vsel %vm453, %v386, %v485
    %v518 = vsel %vm454, %v389, %v486
    %v519 = vsel %vm455, %v392, %v487
    %v520 = vsel %vm456, %v395, %v488
    %v521 = vsel %vm457, %v398, %v489
    %v522 = vsel %vm458, %v401, %v490
    %v523 = vsel %vm459, %v404, %v491
    %v524 = vsel %vm460, %v407, %v492
    %v525 = vsel %vm461, %v410, %v493
    %v526 = vsel %vm462, %v413, %v494
    %v527 = vsel %vm463, %v416, %v495
    %v528 = vsel %vm464, %v419, %v496
    %v529 = vsel %vm465, %v422, %v497
    %v530 = vsel %vm466, %v425, %v498
    %v531 = vsel %vm467, %v428, %v499
    %v532 = vsel %vm468, %v431, %v500
    %v533 = vsel %vm469, %v434, %v501
    %v534 = vsel %vm470, %v437, %v502
    %535 = vst [vmem:[#allocation2] sm:$0xff] %v503
    %536 = vst [vmem:[#allocation2 + $0x8] sm:$0xff] %v504
    %537 = vst [vmem:[#allocation2 + $0x10] sm:$0xff] %v505
    %538 = vst [vmem:[#allocation2 + $0x18] sm:$0xff] %v506
    %539 = vst [vmem:[#allocation2 + $0x20] sm:$0xff] %v507
    %540 = vst [vmem:[#allocation2 + $0x28] sm:$0xff] %v508
    %541 = vst [vmem:[#allocation2 + $0x30] sm:$0xff] %v509
    %542 = vst [vmem:[#allocation2 + $0x38] sm:$0xff] %v510
    %543 = vst [vmem:[#allocation2 + $0x40] sm:$0xff] %v511
    %544 = vst [vmem:[#allocation2 + $0x48] sm:$0xff] %v512
    %545 = vst [vmem:[#allocation2 + $0x50] sm:$0xff] %v513
    %546 = vst [vmem:[#allocation2 + $0x58] sm:$0xff] %v514
    %547 = vst [vmem:[#allocation2 + $0x60] sm:$0xff] %v515
    %548 = vst [vmem:[#allocation2 + $0x68] sm:$0xff] %v516
    %549 = vst [vmem:[#allocation2 + $0x70] sm:$0xff] %v517
    %550 = vst [vmem:[#allocation2 + $0x78] sm:$0xff] %v518
    %s551 = scalar_lea.vmem [#allocation2], 128
    %552 = vst [vmem:[%s551] sm:$0xff] %v519
    %553 = vst [vmem:[%s551 + $0x8] sm:$0xff] %v520
    %554 = vst [vmem:[%s551 + $0x10] sm:$0xff] %v521
    %555 = vst [vmem:[%s551 + $0x18] sm:$0xff] %v522
    %556 = vst [vmem:[%s551 + $0x20] sm:$0xff] %v523
    %557 = vst [vmem:[%s551 + $0x28] sm:$0xff] %v524
    %558 = vst [vmem:[%s551 + $0x30] sm:$0xff] %v525
    %559 = vst [vmem:[%s551 + $0x38] sm:$0xff] %v526
    %560 = vst [vmem:[%s551 + $0x40] sm:$0xff] %v527
    %561 = vst [vmem:[%s551 + $0x48] sm:$0xff] %v528
    %562 = vst [vmem:[%s551 + $0x50] sm:$0xff] %v529
    %563 = vst [vmem:[%s551 + $0x58] sm:$0xff] %v530
    %564 = vst [vmem:[%s551 + $0x60] sm:$0xff] %v531
    %565 = vst [vmem:[%s551 + $0x68] sm:$0xff] %v532
    %566 = vst [vmem:[%s551 + $0x70] sm:$0xff] %v533
    %567 = vst [vmem:[%s551 + $0x78] sm:$0xff] %v534
    // Predicated region
    $region22: #{tpu_custom_call.1} parent=1 // pred_check
      _
    $region23: #{tpu_custom_call.1} parent=1 // pred_check_branch
      %569 = sbr.rel (0) target = $region25
    $region24: #{tpu_custom_call.1} parent=1 // pred_region
      %571 = vsyncadd [#allocation3], 0
      %s572 = sshll.u32 [#allocation2], 4
      %s573 = int_to_ptr.vmem [resolvable:$true] %s572
      %s574 = sshll.u32 %s5, 4
      %s575 = int_to_ptr.hbm [resolvable:$true] %s574
      %580 = dma.vmem_to_hbm [thread:$0]  %s573, 4096, %s575, [#allocation3], 128, 128, 8
    $region25: #{tpu_custom_call.1} parent=1 // pred_fallthru
      _
    // Predicated region
    $region26: #{tpu_custom_call.1} parent=1 // pred_check
      _
    $region27: #{tpu_custom_call.1} parent=1 // pred_check_branch
      %582 = sbr.rel (0) target = $region29
    $region28: #{tpu_custom_call.1} parent=1 // pred_region
      %584 = dma.done [#allocation3], 4096
    $region29: #{tpu_custom_call.1} parent=1 // pred_fallthru
      _
    %585 = vsyncpa [#allocation3], 1

</llo_original>
